<compile_context>
chip_gen: v6e
topology: v6e:2x2x1
jax: 0.10.0
libtpu: 0.0.40
codegen_flags: <defaults>
</compile_context>

<pallas_src>
import functools

import jax
import jax.numpy as jnp
from jax import lax
from jax.experimental import pallas as pl
from jax.experimental.pallas import tpu as pltpu


def _attn_kernel(qw_ref, key_ref, out_ref, att_ref, *, softmax_over_k):
    # qw_ref:  (K, d)      bf16  -- pre-projected, pre-scaled query (batch invariant)
    # key_ref: (Bt, N, d)  bf16  -- Bt batches of keys
    # out_ref: (Bt, K, d)  f32
    # att_ref: (Bt, K, N)  f32
    qw = qw_ref[...]                       # bf16, feeds the MXU directly (f32 accumulation)
    Bt = key_ref.shape[0]

    # Bt is a small static constant (capped in the tile picker), so the static unrolled
    # loop stays LLO-visible; each iteration loads its key tile from the ref and writes
    # its results straight to the output blocks, keeping vreg pressure flat.
    for bt in range(Bt):
        k_b = key_ref[bt]                  # (N, d) bf16

        # logits = qw @ k_b^T as a last-dim contraction (no transpose / XLU).
        logits = lax.dot_general(
            qw, k_b,
            dimension_numbers=(((1,), (1,)), ((), ())),
            preferred_element_type=jnp.float32)        # (K, N) f32

        ax = 0 if softmax_over_k else 1
        m = jnp.max(logits, axis=ax, keepdims=True)
        e = jnp.exp(logits - m)
        s = jnp.sum(e, axis=ax, keepdims=True)
        att = e * pl.reciprocal(s, approx=True)        # EUP reciprocal (free slot)

        att_ref[bt] = att.astype(att_ref.dtype)
        # out[bt] = att @ key[bt] : bf16 MXU inputs, f32 accumulation.
        out_ref[bt] = jnp.dot(
            att.astype(jnp.bfloat16), k_b,
            preferred_element_type=jnp.float32).astype(out_ref.dtype)


def _round_up(x, m):
    return (x + m - 1) // m * m


def _vmem_budget_and_limit():
    """Generation-aware (tile budget, scoped VMEM limit) in bytes."""
    cap = 64 * 1024 * 1024                 # conservative default (v7x per-TC VMEM)
    try:
        cap = int(getattr(pltpu.get_tpu_info(), "vmem_capacity_bytes", cap))
    except Exception:
        pass
    # v5e/v6e (128 MiB): limit 96 MiB, budget 64 MiB.  v7x (64 MiB/TC): limit 48, budget 32.
    limit = min((3 * cap) // 4, 96 * 1024 * 1024)
    budget = min(cap // 2, 64 * 1024 * 1024)
    return budget, limit


def _step_vmem_bytes(bt, K, N, d):
    """VMEM for one grid step: double-buffered blocks + in-kernel temps + tile padding."""
    Kp8, Kp16 = _round_up(K, 8), _round_up(K, 16)
    Np16 = _round_up(N, 16)
    Npl, dpl = _round_up(N, 128), _round_up(d, 128)
    key_blk = bt * Np16 * dpl * 2          # bf16
    out_blk = bt * Kp8 * dpl * 4           # f32
    att_blk = bt * Kp8 * Npl * 4           # f32
    qw_blk = Kp16 * dpl * 2                # bf16, resident
    # per-bt temporaries: logits / e / att in f32 (+ slack), one key tile, one out tile
    temps = 4 * Kp8 * Npl * 4 + Np16 * dpl * 2 + Kp8 * dpl * 4
    return 2 * (key_blk + out_blk + att_blk + qw_blk) + temps


def _pick_batch_tile(b, K, N, d, budget_bytes):
    """Largest divisor of b that fits the VMEM budget, keeps nb >= 2 (v7x megacore) and
    keeps the unrolled per-batch loop small."""
    cap = max(1, min(b // 2 if b >= 2 else 1, 32))
    best = 1
    for bt in range(1, cap + 1):
        if b % bt:
            continue
        if _step_vmem_bytes(bt, K, N, d) > budget_bytes:
            break
        best = bt
    return best


def simple_concat_attention(query, key, W, dim=-2, batch_tile=None):
    """query: [K, d], key: [b, N, d], W: [d, d].

    Returns (out [b, K, d] f32, att [b, K, N] f32), matching the PyTorch module's
    (2-D query, 3-D key) branch with att_mask=None.
    """
    assert query.ndim == 2 and key.ndim == 3, "only the (2D query, 3D key) branch is implemented"
    # TODO(synk): the (2D query, 2D key) branch and att_mask support are not wired up here.
    assert dim in (-2, -1, 1, 2), "softmax over the batch axis (dim=0) is not supported"
    K, d = query.shape
    b, N, dk = key.shape
    assert d == dk and W.shape == (d, d)
    softmax_over_k = dim in (-2, 1)

    # Hoisted, batch-invariant projection with the 1/sqrt(d) scale folded in (tiny XLA
    # matmul in f32), cast once to bf16 so the kernel matmuls are bf16-native on the MXU.
    qw = jnp.dot(query.astype(jnp.float32), W.astype(jnp.float32)) / jnp.sqrt(jnp.float32(d))
    qw = qw.astype(jnp.bfloat16)
    # bf16 key halves the dominant HBM read and the key VMEM footprint. (If the caller
    # already produces bf16 keys this cast is a no-op / fuses with the producer.)
    key_bf = key.astype(jnp.bfloat16)

    budget, vmem_limit = _vmem_budget_and_limit()
    Bt = batch_tile if batch_tile is not None else _pick_batch_tile(b, K, N, d, budget)
    assert b % Bt == 0, "batch tile must divide the batch size"
    # TODO(synk): ragged batch tiling (prime b) just falls back to Bt=1; no BoundedSlice path.
    nb = b // Bt

    kernel = functools.partial(_attn_kernel, softmax_over_k=softmax_over_k)

    out, att = pl.pallas_call(
        kernel,
        out_shape=(
            jax.ShapeDtypeStruct((b, K, d), jnp.float32),
            jax.ShapeDtypeStruct((b, K, N), jnp.float32),
        ),
        grid_spec=pltpu.PrefetchScalarGridSpec(
            num_scalar_prefetch=0,
            grid=(nb,),
            in_specs=[
                pl.BlockSpec((K, d), lambda i: (0, 0)),         # qw: batch-invariant, resident
                pl.BlockSpec((Bt, N, d), lambda i: (i, 0, 0)),  # Bt batches of keys (bf16)
            ],
            out_specs=[
                pl.BlockSpec((Bt, K, d), lambda i: (i, 0, 0)),  # out, written directly
                pl.BlockSpec((Bt, K, N), lambda i: (i, 0, 0)),  # att, written directly
            ],
        ),
        compiler_params=pltpu.CompilerParams(
            dimension_semantics=("parallel",),
            vmem_limit_bytes=vmem_limit,
        ),
    )(qw, key_bf)
    return out, att


def _reference(query, key, W, dim=-2):
    d = query.shape[-1]
    b = key.shape[0]
    q = jnp.tile(query[None], (b, 1, 1)) @ W / jnp.sqrt(jnp.float32(d))
    att = jnp.einsum("bkd,bnd->bkn", q, key)
    att = jax.nn.softmax(att, axis=dim)
    out = jnp.einsum("bkn,bnd->bkd", att, key)
    return out, att


if __name__ == "__main__":
    # Small shapes: batch=2, K(query rows)=8, N(key rows)=16, emb_dim=32.
    b, K, N, d = 2, 8, 16, 32
    root = jax.random.PRNGKey(0)
    kq, kk, kw = jax.random.split(root, 3)
    query = jax.random.normal(kq, (K, d), dtype=jnp.float32)
    key = jax.random.normal(kk, (b, N, d), dtype=jnp.float32)
    # Deterministic synthetic weight (the PyTorch module leaves W uninitialized).
    W = jax.random.normal(kw, (d, d), dtype=jnp.float32) / jnp.sqrt(jnp.float32(d))

    ok = True
    for dim in (-2, -1):
        out, att = simple_concat_attention(query, key, W, dim=dim)
        jax.block_until_ready((out, att))
        out_r, att_r = _reference(query, key, W, dim=dim)
        # bf16 MXU inputs + approx EUP reciprocal bound the error around ~1e-2.
        ok &= bool(jnp.allclose(out, out_r, atol=3e-2, rtol=3e-2))
        ok &= bool(jnp.allclose(att, att_r, atol=3e-2, rtol=3e-2))
    assert ok, "kernel/reference mismatch"

    print("KERNEL_OK")
</pallas_src>

<mosaic_0001>
module attributes {stable_mosaic.version = 11 : i64} {
  func.func @_attn_kernel(%arg0: i32, %arg1: memref<8x32xbf16, #tpu.memory_space<vmem>>, %arg2: memref<1x16x32xbf16, #tpu.memory_space<vmem>>, %arg3: memref<1x8x32xf32, #tpu.memory_space<vmem>>, %arg4: memref<1x8x16xf32, #tpu.memory_space<vmem>>) attributes {dimension_semantics = [#tpu.dimension_semantics<parallel>], iteration_bounds = array<i64: 2>, scalar_prefetch = 0 : i64, scratch_operands = 0 : i64, tpu.core_type = #tpu.core_type<tc>, window_params = [{pipeline_mode = #tpu.pipeline_mode<synchronous>, transform_indices = @transform_0, window_bounds = array<i64: 8, 32>}, {transform_indices = @transform_1, window_bounds = array<i64: 1, 16, 32>}, {transform_indices = @transform_2, window_bounds = array<i64: 1, 8, 32>}, {transform_indices = @transform_3, window_bounds = array<i64: 1, 8, 16>}]} {
    %c0 = arith.constant 0 : index
    %c0_0 = arith.constant 0 : index
    %0 = vector.load %arg1[%c0, %c0_0] : memref<8x32xbf16, #tpu.memory_space<vmem>>, vector<8x32xbf16>
    %c0_1 = arith.constant 0 : index
    %c0_2 = arith.constant 0 : index
    %c0_3 = arith.constant 0 : index
    %1 = vector.load %arg2[%c0_1, %c0_2, %c0_3] : memref<1x16x32xbf16, #tpu.memory_space<vmem>>, vector<1x16x32xbf16>
    %2 = vector.shape_cast %1 : vector<1x16x32xbf16> to vector<16x32xbf16>
    %cst = arith.constant dense<0.000000e+00> : vector<8x16xf32>
    %3 = tpu.matmul %0, %2, %cst {dimension_numbers = #tpu.dot_dimension_numbers<[1], [1], [0], [0], [0, 0, 1, 0], [], []>} : vector<8x32xbf16>, vector<16x32xbf16>, vector<8x16xf32> -> vector<8x16xf32>
    %cst_4 = arith.constant dense<0xFF800000> : vector<16xf32>
    %4 = vector.multi_reduction <maximumf>, %3, %cst_4 [0] : vector<8x16xf32> to vector<16xf32>
    %5 = vector.shape_cast %4 : vector<16xf32> to vector<1x16xf32>
    %6 = vector.broadcast %5 : vector<1x16xf32> to vector<8x16xf32>
    %7 = arith.subf %3, %6 : vector<8x16xf32>
    %8 = math.exp %7 : vector<8x16xf32>
    %cst_5 = arith.constant dense<0.000000e+00> : vector<16xf32>
    %9 = vector.multi_reduction <add>, %8, %cst_5 [0] : vector<8x16xf32> to vector<16xf32>
    %10 = vector.shape_cast %9 : vector<16xf32> to vector<1x16xf32>
    %11 = tpu.reciprocal %10 {approx = true} : vector<1x16xf32> -> vector<1x16xf32>
    %12 = vector.broadcast %11 : vector<1x16xf32> to vector<8x16xf32>
    %13 = arith.mulf %8, %12 : vector<8x16xf32>
    %c0_6 = arith.constant 0 : index
    %c0_7 = arith.constant 0 : index
    %c0_8 = arith.constant 0 : index
    %14 = vector.load %arg4[%c0_6, %c0_7, %c0_8] : memref<1x8x16xf32, #tpu.memory_space<vmem>>, vector<1x8x16xf32>
    %15 = vector.shape_cast %14 : vector<1x8x16xf32> to vector<8x16xf32>
    %16 = vector.shape_cast %13 : vector<8x16xf32> to vector<1x8x16xf32>
    tpu.vector_store %arg4[%c0_6, %c0_7, %c0_8], %16 {strides = array<i32>} : memref<1x8x16xf32, #tpu.memory_space<vmem>>, vector<1x8x16xf32>,
    %17 = arith.truncf %13 : vector<8x16xf32> to vector<8x16xbf16>
    %cst_9 = arith.constant dense<0.000000e+00> : vector<8x32xf32>
    %18 = tpu.matmul %17, %2, %cst_9 {dimension_numbers = #tpu.dot_dimension_numbers<[1], [0], [0], [1], [0, 0, 1, 1], [], []>} : vector<8x16xbf16>, vector<16x32xbf16>, vector<8x32xf32> -> vector<8x32xf32>
    %c0_10 = arith.constant 0 : index
    %c0_11 = arith.constant 0 : index
    %c0_12 = arith.constant 0 : index
    %19 = vector.load %arg3[%c0_10, %c0_11, %c0_12] : memref<1x8x32xf32, #tpu.memory_space<vmem>>, vector<1x8x32xf32>
    %20 = vector.shape_cast %19 : vector<1x8x32xf32> to vector<8x32xf32>
    %21 = vector.shape_cast %18 : vector<8x32xf32> to vector<1x8x32xf32>
    tpu.vector_store %arg3[%c0_10, %c0_11, %c0_12], %21 {strides = array<i32>} : memref<1x8x32xf32, #tpu.memory_space<vmem>>, vector<1x8x32xf32>,
    return
  }
  func.func @transform_0(%arg0: i32) -> (i32, i32) {
    %c0_i32 = arith.constant 0 : i32
    %c0_i32_0 = arith.constant 0 : i32
    %c0_i32_1 = arith.constant 0 : i32
    return %c0_i32, %c0_i32_0 : i32, i32
  }
  func.func @transform_1(%arg0: i32) -> (i32, i32, i32) {
    %c0_i32 = arith.constant 0 : i32
    %c0_i32_0 = arith.constant 0 : i32
    %c0_i32_1 = arith.constant 0 : i32
    return %arg0, %c0_i32, %c0_i32_0 : i32, i32, i32
  }
  func.func @transform_2(%arg0: i32) -> (i32, i32, i32) {
    %c0_i32 = arith.constant 0 : i32
    %c0_i32_0 = arith.constant 0 : i32
    %c0_i32_1 = arith.constant 0 : i32
    return %arg0, %c0_i32, %c0_i32_0 : i32, i32, i32
  }
  func.func @transform_3(%arg0: i32) -> (i32, i32, i32) {
    %c0_i32 = arith.constant 0 : i32
    %c0_i32_0 = arith.constant 0 : i32
    %c0_i32_1 = arith.constant 0 : i32
    return %arg0, %c0_i32, %c0_i32_0 : i32, i32, i32
  }
}

</mosaic_0001>

<llo_original>
// kernel: tpu_custom_call.1
$region0: #{tpu_custom_call.1}
  #allocation0 [shape = 'u32[]', space=smem, size = 0x4, offset = 0x4, fixed_abs, tag = 'smem constant byte address 0x4 - core index']
  #allocation1 [shape = 'u32[144,128]{1,0:T(1,128)}', space=vmem, size = 0x12000, scoped, tag = 'internal scratch']
  %s0 = inlined_call_operand.hbm [shape: bf16[8,32], index: 0, kind: input, shape index: {}]
  %s1 = inlined_call_operand.hbm [shape: bf16[2,16,32], index: 1, kind: input, shape index: {}]
  %s2 = inlined_call_operand.hbm [shape: f32[2,8,32], index: 2, kind: output, shape index: {0}]
  %s3 = inlined_call_operand.hbm [shape: f32[2,8,16], index: 3, kind: output, shape index: {1}]
  %4 = xla_tuple %s2, %s3
  %s5 = sld [smem:[#allocation0]]
  $region57: #{tpu_custom_call.1} parent=0
    _
  %s7 = ssub.s32 1, %s5
  %s8 = scalar_select 0, %s7, %s5
  $region1: #{tpu_custom_call.1} parent=0
    #allocation2 [shape = 'u8[2048]{0}', space=vmem, size = 0x800, scoped, tag = 'input window, operand 0, single buffered']
    #allocation3 [shape = 's32[2]{0}', space=sflag, size = 0x8, scoped, tag = 'scoped memory for tpu_custom_call.1']
    #allocation4 [shape = 's32[2]{0}', space=sflag, size = 0x8, scoped, tag = 'scoped memory for tpu_custom_call.1']
    #allocation5 [shape = 'u8[8192]{0}', space=vmem, size = 0x2000, scoped, tag = 'input window, operand 1']
    #allocation6 [shape = 's32[2]{0}', space=sflag, size = 0x8, scoped, tag = 'scoped memory for tpu_custom_call.1']
    #allocation7 [shape = 'u8[8192]{0}', space=vmem, size = 0x2000, scoped, tag = 'output window, operand 0']
    #allocation8 [shape = 'u8[8192]{0}', space=vmem, size = 0x2000, scoped, tag = 'output window, operand 1']
    #allocation9 [shape = 's32[2]{0}', space=sflag, size = 0x8, scoped, tag = 'scoped memory for tpu_custom_call.1']
    %9 = vsyncpa [#allocation3], 0
    %10 = vsyncpa [#allocation6], 0
    %s11 = scalar_lea.sflag [#allocation6], 1
    %12 = vsyncpa %s11, 0
    %13 = vsyncpa [#allocation4], 0
    %s14 = scalar_lea.sflag [#allocation4], 1
    %15 = vsyncpa %s14, 0
    %16 = vsyncpa [#allocation9], 0
    %s17 = scalar_lea.sflag [#allocation9], 1
    %18 = vsyncpa %s17, 0
    loop: start=0, step=1, limit=4
    $region2: #{tpu_custom_call.1} parent=1 // loop_pre_header
      _
    $region3: #{tpu_custom_call.1} parent=1 // loop_header
      %s20 = sphi 0, %s24
      %p21 = scmp.ge.s32.totalorder %s20, 4
      %s28 = sphi 0, %s28
      %s30 = sphi 0, %s28
      %s31 = sphi 0, %s30
      %s45 = sphi 0, %s31
      %s51 = sphi 0, %s53
      %s54 = sphi 0, %s51
      %s55 = sphi 0, %s54
      %s71 = sphi 0, %s55
      %s77 = sphi 0, %s79
      %s80 = sphi 0, %s77
      %s81 = sphi 0, %s80
      %s97 = sphi 0, %s81
      %s103 = sphi 0, %s105
      %s106 = sphi 0, %s103
      %s107 = sphi 0, %s106
      %s123 = sphi 0, %s107
    $region4: #{tpu_custom_call.1} parent=1 // loop_header_branch
      %23 = sbr.rel (%p21) target = $region8
    $region5: #{tpu_custom_call.1} parent=1 // loop_body
      %s25 = ssub.s32 %s20, 1
      %s26 = ssub.s32 %s20, 2
      %s27 = sadd.s32 %s20, 1
      %s29 = sadd.s32 %s28, 1
      %p32 = scmp.eq.s32.totalorder %s20, 1
      %p33 = scmp.ne.s32.totalorder %s28, %s30
      %p34 = scmp.eq.s32.totalorder %s20, 0
      %p35 = por %p33, %p34
      %p36 = scmp.ne.s32.totalorder %s28, %s30
      %p37 = scmp.eq.s32.totalorder %s25, 1
      %p38 = por %p36, %p37
      %p39 = scmp.ne.s32.totalorder %s30, %s31
      %p40 = scmp.eq.s32.totalorder %s25, 0
      %p41 = por %p39, %p40
      %p42 = scmp.ne.s32.totalorder %s30, %s31
      %p43 = scmp.eq.s32.totalorder %s26, 1
      %p44 = por %p42, %p43
      %p46 = scmp.ne.s32.totalorder %s31, %s45
      %p47 = scmp.eq.s32.totalorder %s26, 0
      %p48 = por %p46, %p47
      %s49 = ssub.s32 %s20, %s27
      %p50 = scmp.eq.s32.totalorder %s49, 0
      %s52 = sadd.s32 %s51, 1
      %s53 = scalar_select %p50, %s51, %s52
      %p56 = pneg %p50
      %p57 = scmp.eq.s32.totalorder %s20, 1
      %p58 = por %p56, %p57
      %p59 = scmp.ne.s32.totalorder %s51, %s54
      %p60 = scmp.eq.s32.totalorder %s20, 0
      %p61 = por %p59, %p60
      %p62 = scmp.ne.s32.totalorder %s51, %s54
      %p63 = scmp.eq.s32.totalorder %s25, 1
      %p64 = por %p62, %p63
      %p65 = scmp.ne.s32.totalorder %s54, %s55
      %p66 = scmp.eq.s32.totalorder %s25, 0
      %p67 = por %p65, %p66
      %p68 = scmp.ne.s32.totalorder %s54, %s55
      %p69 = scmp.eq.s32.totalorder %s26, 1
      %p70 = por %p68, %p69
      %p72 = scmp.ne.s32.totalorder %s55, %s71
      %p73 = scmp.eq.s32.totalorder %s26, 0
      %p74 = por %p72, %p73
      %s75 = ssub.s32 %s20, %s27
      %p76 = scmp.eq.s32.totalorder %s75, 0
      %s78 = sadd.s32 %s77, 1
      %s79 = scalar_select %p76, %s77, %s78
      %p82 = pneg %p76
      %p83 = scmp.eq.s32.totalorder %s20, 1
      %p84 = por %p82, %p83
      %p85 = scmp.ne.s32.totalorder %s77, %s80
      %p86 = scmp.eq.s32.totalorder %s20, 0
      %p87 = por %p85, %p86
      %p88 = scmp.ne.s32.totalorder %s77, %s80
      %p89 = scmp.eq.s32.totalorder %s25, 1
      %p90 = por %p88, %p89
      %p91 = scmp.ne.s32.totalorder %s80, %s81
      %p92 = scmp.eq.s32.totalorder %s25, 0
      %p93 = por %p91, %p92
      %p94 = scmp.ne.s32.totalorder %s80, %s81
      %p95 = scmp.eq.s32.totalorder %s26, 1
      %p96 = por %p94, %p95
      %p98 = scmp.ne.s32.totalorder %s81, %s97
      %p99 = scmp.eq.s32.totalorder %s26, 0
      %p100 = por %p98, %p99
      %s101 = ssub.s32 %s20, %s27
      %p102 = scmp.eq.s32.totalorder %s101, 0
      %s104 = sadd.s32 %s103, 1
      %s105 = scalar_select %p102, %s103, %s104
      %p108 = pneg %p102
      %p109 = scmp.eq.s32.totalorder %s20, 1
      %p110 = por %p108, %p109
      %p111 = scmp.ne.s32.totalorder %s103, %s106
      %p112 = scmp.eq.s32.totalorder %s20, 0
      %p113 = por %p111, %p112
      %p114 = scmp.ne.s32.totalorder %s103, %s106
      %p115 = scmp.eq.s32.totalorder %s25, 1
      %p116 = por %p114, %p115
      %p117 = scmp.ne.s32.totalorder %s106, %s107
      %p118 = scmp.eq.s32.totalorder %s25, 0
      %p119 = por %p117, %p118
      %p120 = scmp.ne.s32.totalorder %s106, %s107
      %p121 = scmp.eq.s32.totalorder %s26, 1
      %p122 = por %p120, %p121
      %p124 = scmp.ne.s32.totalorder %s107, %s123
      %p125 = scmp.eq.s32.totalorder %s26, 0
      %p126 = por %p124, %p125
      %p127 = scmp.le.s32.totalorder 1, %s20
      %p128 = scmp.lt.s32.totalorder %s20, 3
      %p129 = pnand %p127, %p128
      %p130 = pneg %p129
      // Predicated region
      $region9: #{tpu_custom_call.1} parent=5 // pred_check
        _
      $region10: #{tpu_custom_call.1} parent=5 // pred_check_branch
        %132 = sbr.rel (%p129) target = $region12
      $region11: #{tpu_custom_call.1} parent=5 // pred_region
        %s133 = ssub.s32 %s20, 1
        // Predicated region
        $region13: #{tpu_custom_call.1} parent=11 // pred_check
          %p134 = pneg %p41
        $region14: #{tpu_custom_call.1} parent=11 // pred_check_branch
          %136 = sbr.rel (%p134) target = $region16
        $region15: #{tpu_custom_call.1} parent=11 // pred_region
          %s138 = ssub.s32 64, 64
          %139 = vsyncadd [#allocation3], %s138
          %s141 = sshll.u32 [#allocation2], 4
          %s142 = int_to_ptr.vmem [resolvable:$true] %s141
          %144 = dma.hbm_to_vmem [thread:$0]  %s0, 64, %s142, [#allocation3]
        $region16: #{tpu_custom_call.1} parent=11 // pred_fallthru
          _
      $region12: #{tpu_custom_call.1} parent=5 // pred_fallthru
        _
      %p145 = scmp.lt.s32.totalorder %s20, 2
      // Predicated region
      $region17: #{tpu_custom_call.1} parent=5 // pred_check
        %p146 = pneg %p145
      $region18: #{tpu_custom_call.1} parent=5 // pred_check_branch
        %148 = sbr.rel (%p146) target = $region20
      $region19: #{tpu_custom_call.1} parent=5 // pred_region
        // Predicated region
        $region21: #{tpu_custom_call.1} parent=19 // pred_check
          %p149 = pneg %p61
        $region22: #{tpu_custom_call.1} parent=19 // pred_check_branch
          %151 = sbr.rel (%p149) target = $region24
        $region23: #{tpu_custom_call.1} parent=19 // pred_region
          %s152 = sand.u32 %s51, 1
          %s153 = scalar_lea.sflag [#allocation6], %s152
          %s154 = sand.u32 %s51, 1
          %s155 = smul.addr %s154, 8
          %s156 = scalar_lea.vmem [#allocation5], %s155
          %s158 = ssub.s32 128, 128
          %159 = vsyncadd %s153, %s158
          %s160 = smul.addr %s20, 2
          %s161 = smul.addr %s160, 64
          %s162 = scalar_lea.hbm %s1, %s161
          %s163 = sshll.u32 %s156, 4
          %s164 = int_to_ptr.vmem [resolvable:$true] %s163
          %169 = dma.hbm_to_vmem [thread:$0]  %s162, 128, %s164, %s153, 64, 64, 4
        $region24: #{tpu_custom_call.1} parent=19 // pred_fallthru
          _
      $region20: #{tpu_custom_call.1} parent=5 // pred_fallthru
        _
      %p170 = scmp.le.s32.totalorder 1, %s20
      %p171 = scmp.lt.s32.totalorder %s20, 3
      %p172 = pnand %p170, %p171
      %p173 = pneg %p172
      // Predicated region
      $region25: #{tpu_custom_call.1} parent=5 // pred_check
        _
      $region26: #{tpu_custom_call.1} parent=5 // pred_check_branch
        %175 = sbr.rel (%p172) target = $region28
      $region27: #{tpu_custom_call.1} parent=5 // pred_region
        %s176 = ssub.s32 %s20, 1
        // Predicated region
        $region29: #{tpu_custom_call.1} parent=27 // pred_check
          %p177 = pneg %p41
        $region30: #{tpu_custom_call.1} parent=27 // pred_check_branch
          %179 = sbr.rel (%p177) target = $region32
        $region31: #{tpu_custom_call.1} parent=27 // pred_region
          %180 = dma.done [#allocation3], 64
        $region32: #{tpu_custom_call.1} parent=27 // pred_fallthru
          _
        %s181 = sand.u32 %s54, 1
        %s182 = scalar_lea.sflag [#allocation6], %s181
        %s183 = sand.u32 %s54, 1
        %s184 = smul.addr %s183, 8
        %s185 = scalar_lea.vmem [#allocation5], %s184
        // Predicated region
        $region33: #{tpu_custom_call.1} parent=27 // pred_check
          %p186 = pneg %p67
        $region34: #{tpu_custom_call.1} parent=27 // pred_check_branch
          %188 = sbr.rel (%p186) target = $region36
        $region35: #{tpu_custom_call.1} parent=27 // pred_region
          %189 = dma.done %s182, 128
        $region36: #{tpu_custom_call.1} parent=27 // pred_fallthru
          _
        %p190 = pneg %p41
        %p191 = pneg %p38
        %s192 = sand.u32 %s54, 1
        %s193 = scalar_lea.sflag [#allocation6], %s192
        %s194 = sand.u32 %s54, 1
        %s195 = smul.addr %s194, 8
        %s196 = scalar_lea.vmem [#allocation5], %s195
        %p197 = pneg %p67
        %p198 = pneg %p64
        %p199 = pneg %p93
        %p200 = pneg %p90
        %s201 = sand.u32 %s80, 1
        %s202 = scalar_lea.sflag [#allocation4], %s201
        %s203 = sand.u32 %s80, 1
        %s204 = smul.addr %s203, 8
        %s205 = scalar_lea.vmem [#allocation7], %s204
        %p206 = pneg %p119
        %p207 = pneg %p116
        %s208 = sand.u32 %s106, 1
        %s209 = scalar_lea.sflag [#allocation9], %s208
        %s210 = sand.u32 %s106, 1
        %s211 = smul.addr %s210, 8
        %s212 = scalar_lea.vmem [#allocation8], %s211
        %v214 = vld [vmem:[#allocation2] sm:$0xf]
        %v215 = vld [vmem:[%s185] sm:$0xf]
        %v216 = vld [vmem:[%s185 + $0x4] sm:$0xf]
        %v219 = vunpack.c.l.b16 %v215
        %v220 = vunpack.c.l.b16 %v216
        %v221 = vpack.c.b16 %v220, %v219
        %vm222 = vcmask 261120
        %v224 = vsel %vm222, %v214, 0
        %v227 = vsel %vm222, %v221, 0
        %229 = vmatprep.subr.bf16.mxu0 0
        %230 = vmatpush1.bf16.xpose.msra.mxu0 0
        %231 = vmatprep.subr.bf16.mxu0 0
        %232 = vmatpush1.bf16.xpose.msra.mxu0 0
        %233 = vmatprep.subr.bf16.mxu0 0
        %234 = vmatpush1.bf16.xpose.msra.mxu0 0
        %235 = vmatprep.subr.bf16.mxu0 0
        %236 = vmatpush1.bf16.xpose.msra.mxu0 0
        %237 = vmatprep.subr.bf16.mxu0 0
        %238 = vmatpush1.bf16.xpose.msra.mxu0 0
        %239 = vmatprep.subr.bf16.mxu0 0
        %240 = vmatpush1.bf16.xpose.msra.mxu0 0
        %241 = vmatprep.subr.bf16.mxu0 0
        %242 = vmatpush1.bf16.xpose.msra.mxu0 0
        %243 = vmatprep.subr.bf16.mxu0 0
        %244 = vmatpush1.bf16.xpose.msra.mxu0 %v227
        %245 = vmatprep.subr.bf16.mxu0 0
        %246 = vmatpush2.bf16.xpose.msra.mxu0 0
        %247 = vmatprep.subr.bf16.mxu0 0
        %248 = vmatpush2.bf16.xpose.msra.mxu0 0
        %249 = vmatprep.subr.bf16.mxu0 0
        %250 = vmatpush2.bf16.xpose.msra.mxu0 0
        %251 = vmatprep.subr.bf16.mxu0 0
        %252 = vmatpush2.bf16.xpose.msra.mxu0 0
        %253 = vmatprep.subr.bf16.mxu0 0
        %254 = vmatpush2.bf16.xpose.msra.mxu0 0
        %255 = vmatprep.subr.bf16.mxu0 0
        %256 = vmatpush2.bf16.xpose.msra.mxu0 0
        %257 = vmatprep.subr.bf16.mxu0 0
        %258 = vmatpush2.bf16.xpose.msra.mxu0 0
        %259 = vmatprep.subr.bf16.mxu0 0
        %260 = vmatpush2.bf16.xpose.msra.mxu0 0
        %261 = vmatprep.mubr.bf16.mxu0 0
        %262 = vmatmul.mubr.bf16.gmra.mxu0 %v224
        %v263 = vpop.f32.mrf.mxu0
        %v264 = vadd.f32 0.0, %v263
        %v265 = vpop.f32.mrf.mxu0
        %v266 = vpop.f32.mrf.mxu0
        %v267 = vpop.f32.mrf.mxu0
        %268 = vdwg.mxu0
        %vm269 = vcmask 130048
        %v270 = vsel %vm269, %v264, -inf
        %v271 = vrot.slane %v270, 4
        %v272 = vmax.f32 %v270, %v271
        %v273 = vrot.slane %v272, 2
        %v274 = vmax.f32 %v272, %v273
        %v275 = vrot.slane %v274, 1
        %v276 = vmax.f32 %v274, %v275
        %v277 = vsub.f32 %v264, %v276
        %v278 = vmul.f32 %v277, 1.442695
        %v279 = vpow.pop %v278
        %v280 = vsel %vm269, %v279, 0.0
        %v281 = vrot.slane %v280, 4
        %v282 = vadd.f32 %v280, %v281
        %v283 = vrot.slane %v282, 2
        %v284 = vadd.f32 %v282, %v283
        %v285 = vrot.slane %v284, 1
        %v286 = vadd.f32 %v284, %v285
        %v287 = vrcp.pop %v286
        %v288 = vmul.f32 %v279, %v287
        %289 = vst.msk [vmem:[%s212] sm:$0xff] %vm269, %v288
        %v290 = vpack.c.bf16 %v288, %v288
        %v293 = vsel %vm269, %v290, 0
        %295 = vmatprep.subr.bf16.mxu0 0
        %296 = vmatpush1.bf16.msra.mxu0 0
        %297 = vmatprep.subr.bf16.mxu0 0
        %298 = vmatpush1.bf16.msra.mxu0 0
        %299 = vmatprep.subr.bf16.mxu0 0
        %300 = vmatpush1.bf16.msra.mxu0 0
        %301 = vmatprep.subr.bf16.mxu0 0
        %302 = vmatpush1.bf16.msra.mxu0 0
        %303 = vmatprep.subr.bf16.mxu0 0
        %304 = vmatpush1.bf16.msra.mxu0 0
        %305 = vmatprep.subr.bf16.mxu0 0
        %306 = vmatpush1.bf16.msra.mxu0 0
        %307 = vmatprep.subr.bf16.mxu0 0
        %308 = vmatpush1.bf16.msra.mxu0 0
        %309 = vmatprep.subr.bf16.mxu0 0
        %310 = vmatpush1.bf16.msra.mxu0 %v221
        %311 = vmatprep.subr.bf16.mxu0 0
        %312 = vmatpush2.bf16.msra.mxu0 0
        %313 = vmatprep.subr.bf16.mxu0 0
        %314 = vmatpush2.bf16.msra.mxu0 0
        %315 = vmatprep.subr.bf16.mxu0 0
        %316 = vmatpush2.bf16.msra.mxu0 0
        %317 = vmatprep.subr.bf16.mxu0 0
        %318 = vmatpush2.bf16.msra.mxu0 0
        %319 = vmatprep.subr.bf16.mxu0 0
        %320 = vmatpush2.bf16.msra.mxu0 0
        %321 = vmatprep.subr.bf16.mxu0 0
        %322 = vmatpush2.bf16.msra.mxu0 0
        %323 = vmatprep.subr.bf16.mxu0 0
        %324 = vmatpush2.bf16.msra.mxu0 0
        %325 = vmatprep.subr.bf16.mxu0 0
        %326 = vmatpush2.bf16.msra.mxu0 0
        %327 = vmatprep.mubr.bf16.mxu0 0
        %328 = vmatmul.mubr.bf16.gmra.mxu0 %v293
        %v329 = vpop.f32.mrf.mxu0
        %v330 = vadd.f32 0.0, %v329
        %v331 = vpop.f32.mrf.mxu0
        %v332 = vpop.f32.mrf.mxu0
        %v333 = vpop.f32.mrf.mxu0
        %334 = vdwg.mxu0
        %335 = vst.msk [vmem:[%s205] sm:$0xff] %vm222, %v330
        %s336 = sand.u32 %s80, 1
        %s337 = scalar_lea.sflag [#allocation4], %s336
        %s338 = sand.u32 %s80, 1
        %s339 = smul.addr %s338, 8
        %s340 = scalar_lea.vmem [#allocation7], %s339
        %s341 = sand.u32 %s106, 1
        %s342 = scalar_lea.sflag [#allocation9], %s341
        %s343 = sand.u32 %s106, 1
        %s344 = smul.addr %s343, 8
        %s345 = scalar_lea.vmem [#allocation8], %s344
        // Predicated region
        $region37: #{tpu_custom_call.1} parent=27 // pred_check
          %p346 = pneg %p90
        $region38: #{tpu_custom_call.1} parent=27 // pred_check_branch
          %348 = sbr.rel (%p346) target = $region40
        $region39: #{tpu_custom_call.1} parent=27 // pred_region
          %s350 = ssub.s32 128, 128
          %351 = vsyncadd %s337, %s350
          %s352 = smul.addr %s25, 128
          %s353 = scalar_lea.hbm %s2, %s352
          %s355 = sshll.u32 %s340, 4
          %s356 = int_to_ptr.vmem [resolvable:$true] %s355
          %358 = dma.vmem_to_hbm [thread:$0]  %s356, 128, %s353, %s337
        $region40: #{tpu_custom_call.1} parent=27 // pred_fallthru
          _
        // Predicated region
        $region41: #{tpu_custom_call.1} parent=27 // pred_check
          %p359 = pneg %p116
        $region42: #{tpu_custom_call.1} parent=27 // pred_check_branch
          %361 = sbr.rel (%p359) target = $region44
        $region43: #{tpu_custom_call.1} parent=27 // pred_region
          %s363 = ssub.s32 128, 128
          %364 = vsyncadd %s342, %s363
          %s365 = smul.addr %s25, 128
          %s366 = scalar_lea.hbm %s3, %s365
          %s368 = sshll.u32 %s345, 4
          %s369 = int_to_ptr.vmem [resolvable:$true] %s368
          %371 = dma.vmem_to_hbm [thread:$0]  %s369, 128, %s366, %s342
        $region44: #{tpu_custom_call.1} parent=27 // pred_fallthru
          _
      $region28: #{tpu_custom_call.1} parent=5 // pred_fallthru
        _
      %p372 = scmp.le.s32.totalorder 2, %s20
      // Predicated region
      $region45: #{tpu_custom_call.1} parent=5 // pred_check
        %p373 = pneg %p372
      $region46: #{tpu_custom_call.1} parent=5 // pred_check_branch
        %375 = sbr.rel (%p373) target = $region48
      $region47: #{tpu_custom_call.1} parent=5 // pred_region
        %s376 = ssub.s32 %s20, 2
        // Predicated region
        $region49: #{tpu_custom_call.1} parent=47 // pred_check
          %p377 = pneg %p96
        $region50: #{tpu_custom_call.1} parent=47 // pred_check_branch
          %379 = sbr.rel (%p377) target = $region52
        $region51: #{tpu_custom_call.1} parent=47 // pred_region
          %s380 = sand.u32 %s81, 1
          %s381 = scalar_lea.sflag [#allocation4], %s380
          %s382 = sand.u32 %s81, 1
          %s383 = smul.addr %s382, 8
          %s384 = scalar_lea.vmem [#allocation7], %s383
          %385 = dma.done %s381, 128
        $region52: #{tpu_custom_call.1} parent=47 // pred_fallthru
          _
        // Predicated region
        $region53: #{tpu_custom_call.1} parent=47 // pred_check
          %p386 = pneg %p122
        $region54: #{tpu_custom_call.1} parent=47 // pred_check_branch
          %388 = sbr.rel (%p386) target = $region56
        $region55: #{tpu_custom_call.1} parent=47 // pred_region
          %s389 = sand.u32 %s107, 1
          %s390 = scalar_lea.sflag [#allocation9], %s389
          %s391 = sand.u32 %s107, 1
          %s392 = smul.addr %s391, 8
          %s393 = scalar_lea.vmem [#allocation8], %s392
          %394 = dma.done %s390, 128
        $region56: #{tpu_custom_call.1} parent=47 // pred_fallthru
          _
      $region48: #{tpu_custom_call.1} parent=5 // pred_fallthru
        _
    $region6: #{tpu_custom_call.1} parent=1 // loop_footer
      %s24 = sadd.s32 1, %s20
    $region7: #{tpu_custom_call.1} parent=1 // loop_footer_branch
      %19 = sbr.rel target = $region3
    $region8: #{tpu_custom_call.1} parent=1 // loop_exit
      _
    %395 = vsyncpa [#allocation3], 1
    %s396 = scalar_lea.sflag [#allocation3], 1
    %397 = vsyncpa %s396, 1
    %398 = vsyncpa [#allocation6], 1
    %s399 = scalar_lea.sflag [#allocation6], 1
    %400 = vsyncpa %s399, 1
    %401 = vsyncpa [#allocation4], 1
    %s402 = scalar_lea.sflag [#allocation4], 1
    %403 = vsyncpa %s402, 1
    %404 = vsyncpa [#allocation9], 1
    %s405 = scalar_lea.sflag [#allocation9], 1
    %406 = vsyncpa %s405, 1

</llo_original>
